<compile_context>
chip_gen: v7x
topology: tpu7x:2x2x1
jax: 0.10.0
libtpu: 0.0.40
codegen_flags: <defaults>
</compile_context>

<pallas_src>
import functools

import jax
import jax.numpy as jnp
from jax import lax
from jax.experimental import pallas as pl
from jax.experimental.pallas import tpu as pltpu


def _swiglu_gate_f32(x1, x2):
    x1 = x1.astype(jnp.float32)
    x2 = x2.astype(jnp.float32)
    # sigmoid(1.702*x) == 0.5 * (1 + tanh(0.851*x))  -> one EUP push per element.
    return (0.5 * x1) * (1.0 + jnp.tanh(0.851 * x1)) * x2


def _dot_zwT(z, w_ref):
    # Weight kept in its native (N, K) layout: contract dim 1 of both operands.
    # Mosaic feeds the transposed operand to the MXU; no HBM-side transpose.
    return lax.dot_general(
        z.astype(w_ref.dtype), w_ref[...],
        dimension_numbers=(((1,), (1,)), ((), ())),
        preferred_element_type=jnp.float32,
    )


def _swiglu_linear_kernel_multi_k(x1_ref, x2_ref, w_ref, o_ref, acc_ref):
    # grid = (M//tm, N//tn, K//tk); K (reduction) is the last, "arbitrary" axis.
    @pl.when(pl.program_id(2) == 0)
    def _():
        acc_ref[...] = jnp.zeros_like(acc_ref)

    z = _swiglu_gate_f32(x1_ref[...], x2_ref[...])
    acc_ref[...] += _dot_zwT(z, w_ref)

    @pl.when(pl.program_id(2) == pl.num_programs(2) - 1)
    def _():
        o_ref[...] = acc_ref[...].astype(o_ref.dtype)


def _swiglu_linear_kernel_single_k(x1_ref, x2_ref, w_ref, o_ref):
    # K fits in a single tile: no accumulator scratch, no zero-init / copy.
    z = _swiglu_gate_f32(x1_ref[...], x2_ref[...])
    o_ref[...] = _dot_zwT(z, w_ref).astype(o_ref.dtype)


def _select_tiles(x_dtype):
    """Per-generation tile presets, keyed off VMEM capacity (v7x = 64 MiB / TC)."""
    vmem_cap = None
    try:
        vmem_cap = pltpu.get_tpu_info().vmem_capacity_bytes
    except Exception:
        pass
    if vmem_cap is None:
        kind = jax.devices()[0].device_kind.lower()
        vmem_cap = (64 << 20) if "7" in kind else (128 << 20)

    if vmem_cap <= (64 << 20):
        # v7x-class: ~310 flops/byte to roofline -> 1024 tiles suffice; keep the
        # scoped limit well under the 64 MiB physical VMEM and leave >= 2 parallel
        # (i, j) blocks for the two TensorCores on real shapes.
        tm, tn, tk, vmem_limit = 1024, 1024, 1024, 48 << 20
    else:
        # v5e / v6e (128 MiB VMEM).  v6e is the most BW-starved (~680 flops/byte),
        # so tm = tn = 2048; total VMEM ~56 MiB at bf16 with double buffering.
        tm, tn, tk, vmem_limit = 2048, 2048, 1024, 96 << 20

    if jnp.dtype(x_dtype).itemsize >= 4:
        # f32 activations double every buffer: halve the N tile to stay in budget.
        tn //= 2
    return tm, tn, tk, vmem_limit


@functools.partial(jax.jit, static_argnames=("tm", "tn", "tk", "vmem_limit_bytes"))
def _swiglu_linear_impl(x, weight, *, tm, tn, tk, vmem_limit_bytes):
    *lead, two_k = x.shape
    n_out, k_in = weight.shape
    assert two_k == 2 * k_in, "last dim of input must be 2 * in_features"

    m = 1
    for d in lead:
        m *= d
    x2d = x.reshape(m, two_k)  # metadata-only reshape; NO HBM slicing into x1/x2

    # Clamp tiles to the problem extents (keep multiples of 256 on v6e/v7x for real
    # shapes; the tiny demo shapes simply clamp to the full extent).
    tm = min(tm, m)
    tn = min(tn, n_out)
    tk = min(tk, k_in)
    # TODO(synk): ragged M/N/K would need padding; not needed for these shapes.
    assert m % tm == 0 and n_out % tn == 0 and k_in % tk == 0

    k_blocks = k_in // tk  # x2 half starts k_blocks block-columns right of x1
    out_shape = jax.ShapeDtypeStruct((m, n_out), x.dtype)

    # TODO(synk): if N//tn > ~3 on production shapes, cache the gated z row-band in
    # VMEM (or run a z pre-pass) to avoid re-reading both x halves per j-pass.
    if k_blocks == 1:
        out2d = pl.pallas_call(
            _swiglu_linear_kernel_single_k,
            out_shape=out_shape,
            grid_spec=pltpu.PrefetchScalarGridSpec(
                num_scalar_prefetch=0,
                grid=(m // tm, n_out // tn),
                in_specs=[
                    pl.BlockSpec((tm, tk), lambda i, j: (i, 0)),  # x1 half
                    pl.BlockSpec((tm, tk), lambda i, j: (i, 1)),  # x2 half
                    pl.BlockSpec((tn, tk), lambda i, j: (j, 0)),  # W (N, K) tile
                ],
                out_specs=pl.BlockSpec((tm, tn), lambda i, j: (i, j)),
            ),
            compiler_params=pltpu.CompilerParams(
                dimension_semantics=("parallel", "parallel"),
                vmem_limit_bytes=vmem_limit_bytes,
            ),
        )(x2d, x2d, weight)
    else:
        out2d = pl.pallas_call(
            _swiglu_linear_kernel_multi_k,
            out_shape=out_shape,
            grid_spec=pltpu.PrefetchScalarGridSpec(
                num_scalar_prefetch=0,
                grid=(m // tm, n_out // tn, k_blocks),
                in_specs=[
                    # Both x1 and x2 tiles are windows into the same (m, 2*k_in) array.
                    pl.BlockSpec((tm, tk), lambda i, j, k: (i, k)),             # x1
                    pl.BlockSpec((tm, tk), lambda i, j, k: (i, k + k_blocks)),  # x2
                    pl.BlockSpec((tn, tk), lambda i, j, k: (j, k)),             # W
                ],
                out_specs=pl.BlockSpec((tm, tn), lambda i, j, k: (i, j)),
                scratch_shapes=[pltpu.VMEM((tm, tn), jnp.float32)],
            ),
            compiler_params=pltpu.CompilerParams(
                dimension_semantics=("parallel", "parallel", "arbitrary"),
                vmem_limit_bytes=vmem_limit_bytes,
            ),
        )(x2d, x2d, weight)

    return out2d.reshape(*lead, n_out)


def swiglu_linear(x, weight):
    """x: (*, 2*in_features), weight: (out_features, in_features) -> (*, out_features)."""
    tm, tn, tk, vmem_limit = _select_tiles(x.dtype)
    return _swiglu_linear_impl(
        x, weight, tm=tm, tn=tn, tk=tk, vmem_limit_bytes=vmem_limit
    )


def _reference(x, weight):
    """Pure-JAX reference matching the PyTorch forward (f32 gate, native matmul dtype)."""
    k_in = weight.shape[1]
    x1 = x[..., :k_in].astype(jnp.float32)
    x2 = x[..., k_in:].astype(jnp.float32)
    z = x1 * jax.nn.sigmoid(1.702 * x1) * x2
    out = jnp.einsum(
        "...k,nk->...n", z.astype(weight.dtype), weight,
        preferred_element_type=jnp.float32,
    )
    return out.astype(x.dtype)


if __name__ == "__main__":
    # Small synthetic config: in_features=256, out_features=128, batch 2 x seq 64.
    in_features = 256
    out_features = 128
    batch, seq = 2, 64
    dtype = jnp.bfloat16   # realistic weight/activation dtype -> bf16 MXU path

    key = jax.random.PRNGKey(0)
    kx, kw = jax.random.split(key)

    # Deterministic "kaiming-uniform-like" init: U(-1/sqrt(in), 1/sqrt(in)).
    bound = 1.0 / (in_features ** 0.5)
    weight = jax.random.uniform(
        kw, (out_features, in_features), jnp.float32, minval=-bound, maxval=bound
    ).astype(dtype)
    x = jax.random.normal(kx, (batch, seq, 2 * in_features), jnp.float32).astype(dtype)

    out = swiglu_linear(x, weight)
    out = jax.block_until_ready(out)

    ref = _reference(x, weight)
    assert out.shape == (batch, seq, out_features)
    assert jnp.allclose(
        out.astype(jnp.float32), ref.astype(jnp.float32), atol=2e-2, rtol=2e-2
    ), "mismatch vs reference"

    print("KERNEL_OK")
</pallas_src>

<mosaic_0001>
module attributes {stable_mosaic.version = 11 : i64} {
  func.func @_swiglu_linear_kernel_single_k(%arg0: i32, %arg1: i32, %arg2: memref<128x256xbf16, #tpu.memory_space<vmem>>, %arg3: memref<128x256xbf16, #tpu.memory_space<vmem>>, %arg4: memref<128x256xbf16, #tpu.memory_space<vmem>>, %arg5: memref<128x128xbf16, #tpu.memory_space<vmem>>) attributes {dimension_semantics = [#tpu.dimension_semantics<parallel>, #tpu.dimension_semantics<parallel>], iteration_bounds = array<i64: 1, 1>, scalar_prefetch = 0 : i64, scratch_operands = 0 : i64, tpu.core_type = #tpu.core_type<tc>, window_params = [{transform_indices = @transform_0, window_bounds = array<i64: 128, 256>}, {transform_indices = @transform_1, window_bounds = array<i64: 128, 256>}, {transform_indices = @transform_2, window_bounds = array<i64: 128, 256>}, {transform_indices = @transform_3, window_bounds = array<i64: 128, 128>}]} {
    %c0 = arith.constant 0 : index
    %c0_0 = arith.constant 0 : index
    %0 = vector.load %arg2[%c0, %c0_0] : memref<128x256xbf16, #tpu.memory_space<vmem>>, vector<128x256xbf16>
    %c0_1 = arith.constant 0 : index
    %c0_2 = arith.constant 0 : index
    %1 = vector.load %arg3[%c0_1, %c0_2] : memref<128x256xbf16, #tpu.memory_space<vmem>>, vector<128x256xbf16>
    %2 = arith.extf %0 : vector<128x256xbf16> to vector<128x256xf32>
    %3 = arith.extf %1 : vector<128x256xbf16> to vector<128x256xf32>
    %cst = arith.constant 5.000000e-01 : f32
    %4 = vector.broadcast %cst : f32 to vector<128x256xf32>
    %5 = arith.mulf %4, %2 : vector<128x256xf32>
    %cst_3 = arith.constant 8.510000e-01 : f32
    %6 = vector.broadcast %cst_3 : f32 to vector<128x256xf32>
    %7 = arith.mulf %6, %2 : vector<128x256xf32>
    %8 = math.tanh %7 : vector<128x256xf32>
    %cst_4 = arith.constant 1.000000e+00 : f32
    %9 = vector.broadcast %cst_4 : f32 to vector<128x256xf32>
    %10 = arith.addf %9, %8 : vector<128x256xf32>
    %11 = arith.mulf %5, %10 : vector<128x256xf32>
    %12 = arith.mulf %11, %3 : vector<128x256xf32>
    %13 = arith.truncf %12 : vector<128x256xf32> to vector<128x256xbf16>
    %c0_5 = arith.constant 0 : index
    %c0_6 = arith.constant 0 : index
    %14 = vector.load %arg4[%c0_5, %c0_6] : memref<128x256xbf16, #tpu.memory_space<vmem>>, vector<128x256xbf16>
    %cst_7 = arith.constant dense<0.000000e+00> : vector<128x128xf32>
    %15 = tpu.matmul %13, %14, %cst_7 {dimension_numbers = #tpu.dot_dimension_numbers<[1], [1], [0], [0], [0, 0, 1, 0], [], []>} : vector<128x256xbf16>, vector<128x256xbf16>, vector<128x128xf32> -> vector<128x128xf32>
    %16 = arith.truncf %15 : vector<128x128xf32> to vector<128x128xbf16>
    %c0_8 = arith.constant 0 : index
    %c0_9 = arith.constant 0 : index
    %17 = vector.load %arg5[%c0_8, %c0_9] : memref<128x128xbf16, #tpu.memory_space<vmem>>, vector<128x128xbf16>
    tpu.vector_store %arg5[%c0_8, %c0_9], %16 {strides = array<i32>} : memref<128x128xbf16, #tpu.memory_space<vmem>>, vector<128x128xbf16>,
    return
  }
  func.func @transform_0(%arg0: i32, %arg1: i32) -> (i32, i32) {
    %c0_i32 = arith.constant 0 : i32
    %c0_i32_0 = arith.constant 0 : i32
    return %arg0, %c0_i32 : i32, i32
  }
  func.func @transform_1(%arg0: i32, %arg1: i32) -> (i32, i32) {
    %c1_i32 = arith.constant 1 : i32
    %c0_i32 = arith.constant 0 : i32
    return %arg0, %c1_i32 : i32, i32
  }
  func.func @transform_2(%arg0: i32, %arg1: i32) -> (i32, i32) {
    %c0_i32 = arith.constant 0 : i32
    %c0_i32_0 = arith.constant 0 : i32
    return %arg1, %c0_i32 : i32, i32
  }
  func.func @transform_3(%arg0: i32, %arg1: i32) -> (i32, i32) {
    %c0_i32 = arith.constant 0 : i32
    return %arg0, %arg1 : i32, i32
  }
}

</mosaic_0001>

<llo_original>
// kernel: _swiglu_linear_impl.1
$region0: #{_swiglu_linear_impl.1}
  #allocation0 [shape = 'u32[]', space=smem, size = 0x4, offset = 0x4, fixed_abs, tag = 'smem constant byte address 0x4 - core index']
  #allocation1 [shape = 'u32[144,128]{1,0:T(1,128)}', space=vmem, size = 0x12000, scoped, tag = 'internal scratch']
  %s0 = inlined_call_operand.hbm [shape: bf16[128,512], index: 0, kind: input, shape index: {}, may-alias: {0,1}]
  %s1 = inlined_call_operand.hbm [shape: bf16[128,512], index: 1, kind: input, shape index: {}, may-alias: {0,1}]
  %s2 = inlined_call_operand.hbm [shape: bf16[128,256], index: 2, kind: input, shape index: {}]
  %s3 = inlined_call_operand.hbm [shape: bf16[128,128], index: 3, kind: output, shape index: {}]
  %s4 = sld [smem:[#allocation0]]
  $region34: #{_swiglu_linear_impl.1} parent=0
    _
  %s6 = ssub.s32 1, %s4
  %s7 = scalar_select 0, %s6, %s4
  $region1: #{_swiglu_linear_impl.1} parent=0
    #allocation2 [shape = 'u8[65536]{0}', space=vmem, size = 0x10000, scoped, tag = 'input window, operand 0, single buffered']
    #allocation3 [shape = 's32[1]{0}', space=sflag, size = 0x4, scoped, tag = 'scoped memory for _swiglu_linear_impl.1']
    #allocation4 [shape = 's32[1]{0}', space=sflag, size = 0x4, scoped, tag = 'scoped memory for _swiglu_linear_impl.1']
    #allocation5 [shape = 'u8[65536]{0}', space=vmem, size = 0x10000, scoped, tag = 'input window, operand 1, single buffered']
    #allocation6 [shape = 's32[1]{0}', space=sflag, size = 0x4, scoped, tag = 'scoped memory for _swiglu_linear_impl.1']
    #allocation7 [shape = 'u8[65536]{0}', space=vmem, size = 0x10000, scoped, tag = 'input window, operand 2, single buffered']
    #allocation8 [shape = 'u8[32768]{0}', space=vmem, size = 0x8000, scoped, tag = 'output window, operand 0, single buffered']
    %8 = vsyncpa [#allocation3], 0
    %9 = vsyncpa [#allocation6], 0
    %10 = vsyncpa [#allocation4], 0
    // Predicated region
    $region2: #{_swiglu_linear_impl.1} parent=1 // pred_check
      _
    $region3: #{_swiglu_linear_impl.1} parent=1 // pred_check_branch
      %12 = sbr.rel (0) target = $region5
    $region4: #{_swiglu_linear_impl.1} parent=1 // pred_region
      %s14 = ssub.s32 2048, 2048
      %15 = vsyncadd [#allocation3], %s14
      %s16 = sshll.u32 [#allocation2], 4
      %s17 = int_to_ptr.vmem [resolvable:$true] %s16
      %22 = dma.hbm_to_vmem [thread:$0]  %s0, 2048, %s17, [#allocation3], 256, 128, 8
    $region5: #{_swiglu_linear_impl.1} parent=1 // pred_fallthru
      _
    // Predicated region
    $region6: #{_swiglu_linear_impl.1} parent=1 // pred_check
      _
    $region7: #{_swiglu_linear_impl.1} parent=1 // pred_check_branch
      %24 = sbr.rel (0) target = $region9
    $region8: #{_swiglu_linear_impl.1} parent=1 // pred_region
      %s26 = ssub.s32 2048, 2048
      %27 = vsyncadd [#allocation6], %s26
      %s28 = scalar_lea.hbm %s1, 128
      %s29 = sshll.u32 [#allocation5], 4
      %s30 = int_to_ptr.vmem [resolvable:$true] %s29
      %35 = dma.hbm_to_vmem [thread:$0]  %s28, 2048, %s30, [#allocation6], 256, 128, 8
    $region9: #{_swiglu_linear_impl.1} parent=1 // pred_fallthru
      _
    // Predicated region
    $region10: #{_swiglu_linear_impl.1} parent=1 // pred_check
      _
    $region11: #{_swiglu_linear_impl.1} parent=1 // pred_check_branch
      %37 = sbr.rel (0) target = $region13
    $region12: #{_swiglu_linear_impl.1} parent=1 // pred_region
      %s39 = ssub.s32 2048, 2048
      %40 = vsyncadd [#allocation6], %s39
      %s41 = sshll.u32 [#allocation7], 4
      %s42 = int_to_ptr.vmem [resolvable:$true] %s41
      %47 = dma.hbm_to_vmem [thread:$0]  %s2, 2048, %s42, [#allocation6], 128, 128, 8
    $region13: #{_swiglu_linear_impl.1} parent=1 // pred_fallthru
      _
    // Predicated region
    $region14: #{_swiglu_linear_impl.1} parent=1 // pred_check
      _
    $region15: #{_swiglu_linear_impl.1} parent=1 // pred_check_branch
      %49 = sbr.rel (0) target = $region17
    $region16: #{_swiglu_linear_impl.1} parent=1 // pred_region
      %50 = dma.done [#allocation3], 2048
    $region17: #{_swiglu_linear_impl.1} parent=1 // pred_fallthru
      _
    // Predicated region
    $region18: #{_swiglu_linear_impl.1} parent=1 // pred_check
      _
    $region19: #{_swiglu_linear_impl.1} parent=1 // pred_check_branch
      %52 = sbr.rel (0) target = $region21
    $region20: #{_swiglu_linear_impl.1} parent=1 // pred_region
      %53 = dma.done [#allocation6], 2048
    $region21: #{_swiglu_linear_impl.1} parent=1 // pred_fallthru
      _
    // Predicated region
    $region22: #{_swiglu_linear_impl.1} parent=1 // pred_check
      _
    $region23: #{_swiglu_linear_impl.1} parent=1 // pred_check_branch
      %55 = sbr.rel (0) target = $region25
    $region24: #{_swiglu_linear_impl.1} parent=1 // pred_region
      %56 = dma.done [#allocation6], 2048
    $region25: #{_swiglu_linear_impl.1} parent=1 // pred_fallthru
      _
    %v58 = vld [vmem:[#allocation2] sm:$0xff]
    %v59 = vld [vmem:[#allocation2 + $0x8] sm:$0xff]
    %v60 = vld [vmem:[#allocation2 + $0x10] sm:$0xff]
    %v61 = vld [vmem:[#allocation2 + $0x18] sm:$0xff]
    %v62 = vld [vmem:[#allocation2 + $0x20] sm:$0xff]
    %v63 = vld [vmem:[#allocation2 + $0x28] sm:$0xff]
    %v64 = vld [vmem:[#allocation2 + $0x30] sm:$0xff]
    %v65 = vld [vmem:[#allocation2 + $0x38] sm:$0xff]
    %v66 = vld [vmem:[#allocation2 + $0x40] sm:$0xff]
    %v67 = vld [vmem:[#allocation2 + $0x48] sm:$0xff]
    %v68 = vld [vmem:[#allocation2 + $0x50] sm:$0xff]
    %v69 = vld [vmem:[#allocation2 + $0x58] sm:$0xff]
    %v70 = vld [vmem:[#allocation2 + $0x60] sm:$0xff]
    %v71 = vld [vmem:[#allocation2 + $0x68] sm:$0xff]
    %v72 = vld [vmem:[#allocation2 + $0x70] sm:$0xff]
    %v73 = vld [vmem:[#allocation2 + $0x78] sm:$0xff]
    %v74 = vld [vmem:[#allocation5] sm:$0xff]
    %v75 = vld [vmem:[#allocation5 + $0x8] sm:$0xff]
    %v76 = vld [vmem:[#allocation5 + $0x10] sm:$0xff]
    %v77 = vld [vmem:[#allocation5 + $0x18] sm:$0xff]
    %v78 = vld [vmem:[#allocation5 + $0x20] sm:$0xff]
    %v79 = vld [vmem:[#allocation5 + $0x28] sm:$0xff]
    %v80 = vld [vmem:[#allocation5 + $0x30] sm:$0xff]
    %v81 = vld [vmem:[#allocation5 + $0x38] sm:$0xff]
    %v82 = vld [vmem:[#allocation5 + $0x40] sm:$0xff]
    %v83 = vld [vmem:[#allocation5 + $0x48] sm:$0xff]
    %v84 = vld [vmem:[#allocation5 + $0x50] sm:$0xff]
    %v85 = vld [vmem:[#allocation5 + $0x58] sm:$0xff]
    %v86 = vld [vmem:[#allocation5 + $0x60] sm:$0xff]
    %v87 = vld [vmem:[#allocation5 + $0x68] sm:$0xff]
    %v88 = vld [vmem:[#allocation5 + $0x70] sm:$0xff]
    %v89 = vld [vmem:[#allocation5 + $0x78] sm:$0xff]
    %v90 = vunpack.c.l.bf16 %v58
    %v91 = vunpack.c.h.bf16 %v58
    %v92 = vunpack.c.l.bf16 %v59
    %v93 = vunpack.c.h.bf16 %v59
    %v94 = vunpack.c.l.bf16 %v60
    %v95 = vunpack.c.h.bf16 %v60
    %v96 = vunpack.c.l.bf16 %v61
    %v97 = vunpack.c.h.bf16 %v61
    %v98 = vunpack.c.l.bf16 %v62
    %v99 = vunpack.c.h.bf16 %v62
    %v100 = vunpack.c.l.bf16 %v63
    %v101 = vunpack.c.h.bf16 %v63
    %v102 = vunpack.c.l.bf16 %v64
    %v103 = vunpack.c.h.bf16 %v64
    %v104 = vunpack.c.l.bf16 %v65
    %v105 = vunpack.c.h.bf16 %v65
    %v106 = vunpack.c.l.bf16 %v66
    %v107 = vunpack.c.h.bf16 %v66
    %v108 = vunpack.c.l.bf16 %v67
    %v109 = vunpack.c.h.bf16 %v67
    %v110 = vunpack.c.l.bf16 %v68
    %v111 = vunpack.c.h.bf16 %v68
    %v112 = vunpack.c.l.bf16 %v69
    %v113 = vunpack.c.h.bf16 %v69
    %v114 = vunpack.c.l.bf16 %v70
    %v115 = vunpack.c.h.bf16 %v70
    %v116 = vunpack.c.l.bf16 %v71
    %v117 = vunpack.c.h.bf16 %v71
    %v118 = vunpack.c.l.bf16 %v72
    %v119 = vunpack.c.h.bf16 %v72
    %v120 = vunpack.c.l.bf16 %v73
    %v121 = vunpack.c.h.bf16 %v73
    %v122 = vunpack.c.l.bf16 %v74
    %v123 = vunpack.c.h.bf16 %v74
    %v124 = vunpack.c.l.bf16 %v75
    %v125 = vunpack.c.h.bf16 %v75
    %v126 = vunpack.c.l.bf16 %v76
    %v127 = vunpack.c.h.bf16 %v76
    %v128 = vunpack.c.l.bf16 %v77
    %v129 = vunpack.c.h.bf16 %v77
    %v130 = vunpack.c.l.bf16 %v78
    %v131 = vunpack.c.h.bf16 %v78
    %v132 = vunpack.c.l.bf16 %v79
    %v133 = vunpack.c.h.bf16 %v79
    %v134 = vunpack.c.l.bf16 %v80
    %v135 = vunpack.c.h.bf16 %v80
    %v136 = vunpack.c.l.bf16 %v81
    %v137 = vunpack.c.h.bf16 %v81
    %v138 = vunpack.c.l.bf16 %v82
    %v139 = vunpack.c.h.bf16 %v82
    %v140 = vunpack.c.l.bf16 %v83
    %v141 = vunpack.c.h.bf16 %v83
    %v142 = vunpack.c.l.bf16 %v84
    %v143 = vunpack.c.h.bf16 %v84
    %v144 = vunpack.c.l.bf16 %v85
    %v145 = vunpack.c.h.bf16 %v85
    %v146 = vunpack.c.l.bf16 %v86
    %v147 = vunpack.c.h.bf16 %v86
    %v148 = vunpack.c.l.bf16 %v87
    %v149 = vunpack.c.h.bf16 %v87
    %v150 = vunpack.c.l.bf16 %v88
    %v151 = vunpack.c.h.bf16 %v88
    %v152 = vunpack.c.l.bf16 %v89
    %v153 = vunpack.c.h.bf16 %v89
    %v154 = vmul.f32 %v90, 0.5
    %v155 = vmul.f32 %v91, 0.5
    %v156 = vmul.f32 %v92, 0.5
    %v157 = vmul.f32 %v93, 0.5
    %v158 = vmul.f32 %v94, 0.5
    %v159 = vmul.f32 %v95, 0.5
    %v160 = vmul.f32 %v96, 0.5
    %v161 = vmul.f32 %v97, 0.5
    %v162 = vmul.f32 %v98, 0.5
    %v163 = vmul.f32 %v99, 0.5
    %v164 = vmul.f32 %v100, 0.5
    %v165 = vmul.f32 %v101, 0.5
    %v166 = vmul.f32 %v102, 0.5
    %v167 = vmul.f32 %v103, 0.5
    %v168 = vmul.f32 %v104, 0.5
    %v169 = vmul.f32 %v105, 0.5
    %v170 = vmul.f32 %v106, 0.5
    %v171 = vmul.f32 %v107, 0.5
    %v172 = vmul.f32 %v108, 0.5
    %v173 = vmul.f32 %v109, 0.5
    %v174 = vmul.f32 %v110, 0.5
    %v175 = vmul.f32 %v111, 0.5
    %v176 = vmul.f32 %v112, 0.5
    %v177 = vmul.f32 %v113, 0.5
    %v178 = vmul.f32 %v114, 0.5
    %v179 = vmul.f32 %v115, 0.5
    %v180 = vmul.f32 %v116, 0.5
    %v181 = vmul.f32 %v117, 0.5
    %v182 = vmul.f32 %v118, 0.5
    %v183 = vmul.f32 %v119, 0.5
    %v184 = vmul.f32 %v120, 0.5
    %v185 = vmul.f32 %v121, 0.5
    %v186 = vmul.f32 %v90, 0.851
    %v187 = vmul.f32 %v91, 0.851
    %v188 = vmul.f32 %v92, 0.851
    %v189 = vmul.f32 %v93, 0.851
    %v190 = vmul.f32 %v94, 0.851
    %v191 = vmul.f32 %v95, 0.851
    %v192 = vmul.f32 %v96, 0.851
    %v193 = vmul.f32 %v97, 0.851
    %v194 = vmul.f32 %v98, 0.851
    %v195 = vmul.f32 %v99, 0.851
    %v196 = vmul.f32 %v100, 0.851
    %v197 = vmul.f32 %v101, 0.851
    %v198 = vmul.f32 %v102, 0.851
    %v199 = vmul.f32 %v103, 0.851
    %v200 = vmul.f32 %v104, 0.851
    %v201 = vmul.f32 %v105, 0.851
    %v202 = vmul.f32 %v106, 0.851
    %v203 = vmul.f32 %v107, 0.851
    %v204 = vmul.f32 %v108, 0.851
    %v205 = vmul.f32 %v109, 0.851
    %v206 = vmul.f32 %v110, 0.851
    %v207 = vmul.f32 %v111, 0.851
    %v208 = vmul.f32 %v112, 0.851
    %v209 = vmul.f32 %v113, 0.851
    %v210 = vmul.f32 %v114, 0.851
    %v211 = vmul.f32 %v115, 0.851
    %v212 = vmul.f32 %v116, 0.851
    %v213 = vmul.f32 %v117, 0.851
    %v214 = vmul.f32 %v118, 0.851
    %v215 = vmul.f32 %v119, 0.851
    %v216 = vmul.f32 %v120, 0.851
    %v217 = vmul.f32 %v121, 0.851
    %v218 = vtanh.pop %v186
    %v219 = vtanh.pop %v187
    %v220 = vtanh.pop %v188
    %v221 = vtanh.pop %v189
    %v222 = vtanh.pop %v190
    %v223 = vtanh.pop %v191
    %v224 = vtanh.pop %v192
    %v225 = vtanh.pop %v193
    %v226 = vtanh.pop %v194
    %v227 = vtanh.pop %v195
    %v228 = vtanh.pop %v196
    %v229 = vtanh.pop %v197
    %v230 = vtanh.pop %v198
    %v231 = vtanh.pop %v199
    %v232 = vtanh.pop %v200
    %v233 = vtanh.pop %v201
    %v234 = vtanh.pop %v202
    %v235 = vtanh.pop %v203
    %v236 = vtanh.pop %v204
    %v237 = vtanh.pop %v205
    %v238 = vtanh.pop %v206
    %v239 = vtanh.pop %v207
    %v240 = vtanh.pop %v208
    %v241 = vtanh.pop %v209
    %v242 = vtanh.pop %v210
    %v243 = vtanh.pop %v211
    %v244 = vtanh.pop %v212
    %v245 = vtanh.pop %v213
    %v246 = vtanh.pop %v214
    %v247 = vtanh.pop %v215
    %v248 = vtanh.pop %v216
    %v249 = vtanh.pop %v217
    %v250 = vadd.f32 %v218, 1.0
    %v251 = vadd.f32 %v219, 1.0
    %v252 = vadd.f32 %v220, 1.0
    %v253 = vadd.f32 %v221, 1.0
    %v254 = vadd.f32 %v222, 1.0
    %v255 = vadd.f32 %v223, 1.0
    %v256 = vadd.f32 %v224, 1.0
    %v257 = vadd.f32 %v225, 1.0
    %v258 = vadd.f32 %v226, 1.0
    %v259 = vadd.f32 %v227, 1.0
    %v260 = vadd.f32 %v228, 1.0
    %v261 = vadd.f32 %v229, 1.0
    %v262 = vadd.f32 %v230, 1.0
    %v263 = vadd.f32 %v231, 1.0
    %v264 = vadd.f32 %v232, 1.0
    %v265 = vadd.f32 %v233, 1.0
    %v266 = vadd.f32 %v234, 1.0
    %v267 = vadd.f32 %v235, 1.0
    %v268 = vadd.f32 %v236, 1.0
    %v269 = vadd.f32 %v237, 1.0
    %v270 = vadd.f32 %v238, 1.0
    %v271 = vadd.f32 %v239, 1.0
    %v272 = vadd.f32 %v240, 1.0
    %v273 = vadd.f32 %v241, 1.0
    %v274 = vadd.f32 %v242, 1.0
    %v275 = vadd.f32 %v243, 1.0
    %v276 = vadd.f32 %v244, 1.0
    %v277 = vadd.f32 %v245, 1.0
    %v278 = vadd.f32 %v246, 1.0
    %v279 = vadd.f32 %v247, 1.0
    %v280 = vadd.f32 %v248, 1.0
    %v281 = vadd.f32 %v249, 1.0
    %v282 = vmul.f32 %v154, %v250
    %v283 = vmul.f32 %v155, %v251
    %v284 = vmul.f32 %v156, %v252
    %v285 = vmul.f32 %v157, %v253
    %v286 = vmul.f32 %v158, %v254
    %v287 = vmul.f32 %v159, %v255
    %v288 = vmul.f32 %v160, %v256
    %v289 = vmul.f32 %v161, %v257
    %v290 = vmul.f32 %v162, %v258
    %v291 = vmul.f32 %v163, %v259
    %v292 = vmul.f32 %v164, %v260
    %v293 = vmul.f32 %v165, %v261
    %v294 = vmul.f32 %v166, %v262
    %v295 = vmul.f32 %v167, %v263
    %v296 = vmul.f32 %v168, %v264
    %v297 = vmul.f32 %v169, %v265
    %v298 = vmul.f32 %v170, %v266
    %v299 = vmul.f32 %v171, %v267
    %v300 = vmul.f32 %v172, %v268
    %v301 = vmul.f32 %v173, %v269
    %v302 = vmul.f32 %v174, %v270
    %v303 = vmul.f32 %v175, %v271
    %v304 = vmul.f32 %v176, %v272
    %v305 = vmul.f32 %v177, %v273
    %v306 = vmul.f32 %v178, %v274
    %v307 = vmul.f32 %v179, %v275
    %v308 = vmul.f32 %v180, %v276
    %v309 = vmul.f32 %v181, %v277
    %v310 = vmul.f32 %v182, %v278
    %v311 = vmul.f32 %v183, %v279
    %v312 = vmul.f32 %v184, %v280
    %v313 = vmul.f32 %v185, %v281
    %v314 = vmul.f32 %v282, %v122
    %v315 = vmul.f32 %v283, %v123
    %v316 = vmul.f32 %v284, %v124
    %v317 = vmul.f32 %v285, %v125
    %v318 = vmul.f32 %v286, %v126
    %v319 = vmul.f32 %v287, %v127
    %v320 = vmul.f32 %v288, %v128
    %v321 = vmul.f32 %v289, %v129
    %v322 = vmul.f32 %v290, %v130
    %v323 = vmul.f32 %v291, %v131
    %v324 = vmul.f32 %v292, %v132
    %v325 = vmul.f32 %v293, %v133
    %v326 = vmul.f32 %v294, %v134
    %v327 = vmul.f32 %v295, %v135
    %v328 = vmul.f32 %v296, %v136
    %v329 = vmul.f32 %v297, %v137
    %v330 = vmul.f32 %v298, %v138
    %v331 = vmul.f32 %v299, %v139
    %v332 = vmul.f32 %v300, %v140
    %v333 = vmul.f32 %v301, %v141
    %v334 = vmul.f32 %v302, %v142
    %v335 = vmul.f32 %v303, %v143
    %v336 = vmul.f32 %v304, %v144
    %v337 = vmul.f32 %v305, %v145
    %v338 = vmul.f32 %v306, %v146
    %v339 = vmul.f32 %v307, %v147
    %v340 = vmul.f32 %v308, %v148
    %v341 = vmul.f32 %v309, %v149
    %v342 = vmul.f32 %v310, %v150
    %v343 = vmul.f32 %v311, %v151
    %v344 = vmul.f32 %v312, %v152
    %v345 = vmul.f32 %v313, %v153
    %v346 = vpack.c.bf16 %v316, %v314
    %v347 = vpack.c.bf16 %v317, %v315
    %v348 = vpack.c.bf16 %v320, %v318
    %v349 = vpack.c.bf16 %v321, %v319
    %v350 = vpack.c.bf16 %v324, %v322
    %v351 = vpack.c.bf16 %v325, %v323
    %v352 = vpack.c.bf16 %v328, %v326
    %v353 = vpack.c.bf16 %v329, %v327
    %v354 = vpack.c.bf16 %v332, %v330
    %v355 = vpack.c.bf16 %v333, %v331
    %v356 = vpack.c.bf16 %v336, %v334
    %v357 = vpack.c.bf16 %v337, %v335
    %v358 = vpack.c.bf16 %v340, %v338
    %v359 = vpack.c.bf16 %v341, %v339
    %v360 = vpack.c.bf16 %v344, %v342
    %v361 = vpack.c.bf16 %v345, %v343
    %v362 = vld [vmem:[#allocation7] sm:$0xff]
    %v363 = vld [vmem:[#allocation7 + $0x8] sm:$0xff]
    %v364 = vld [vmem:[#allocation7 + $0x10] sm:$0xff]
    %v365 = vld [vmem:[#allocation7 + $0x18] sm:$0xff]
    %v366 = vld [vmem:[#allocation7 + $0x20] sm:$0xff]
    %v367 = vld [vmem:[#allocation7 + $0x28] sm:$0xff]
    %v368 = vld [vmem:[#allocation7 + $0x30] sm:$0xff]
    %v369 = vld [vmem:[#allocation7 + $0x38] sm:$0xff]
    %v370 = vld [vmem:[#allocation7 + $0x40] sm:$0xff]
    %v371 = vld [vmem:[#allocation7 + $0x48] sm:$0xff]
    %v372 = vld [vmem:[#allocation7 + $0x50] sm:$0xff]
    %v373 = vld [vmem:[#allocation7 + $0x58] sm:$0xff]
    %v374 = vld [vmem:[#allocation7 + $0x60] sm:$0xff]
    %v375 = vld [vmem:[#allocation7 + $0x68] sm:$0xff]
    %v376 = vld [vmem:[#allocation7 + $0x70] sm:$0xff]
    %v377 = vld [vmem:[#allocation7 + $0x78] sm:$0xff]
    %v394 = vunpack.c.l.b16 %v362
    %v395 = vunpack.c.h.b16 %v362
    %v396 = vunpack.c.l.b16 %v363
    %v397 = vunpack.c.h.b16 %v363
    %v398 = vunpack.c.l.b16 %v364
    %v399 = vunpack.c.h.b16 %v364
    %v400 = vunpack.c.l.b16 %v365
    %v401 = vunpack.c.h.b16 %v365
    %v402 = vunpack.c.l.b16 %v366
    %v403 = vunpack.c.h.b16 %v366
    %v404 = vunpack.c.l.b16 %v367
    %v405 = vunpack.c.h.b16 %v367
    %v406 = vunpack.c.l.b16 %v368
    %v407 = vunpack.c.h.b16 %v368
    %v408 = vunpack.c.l.b16 %v369
    %v409 = vunpack.c.h.b16 %v369
    %v410 = vunpack.c.l.b16 %v370
    %v411 = vunpack.c.h.b16 %v370
    %v412 = vunpack.c.l.b16 %v371
    %v413 = vunpack.c.h.b16 %v371
    %v414 = vunpack.c.l.b16 %v372
    %v415 = vunpack.c.h.b16 %v372
    %v416 = vunpack.c.l.b16 %v373
    %v417 = vunpack.c.h.b16 %v373
    %v418 = vunpack.c.l.b16 %v374
    %v419 = vunpack.c.h.b16 %v374
    %v420 = vunpack.c.l.b16 %v375
    %v421 = vunpack.c.h.b16 %v375
    %v422 = vunpack.c.l.b16 %v376
    %v423 = vunpack.c.h.b16 %v376
    %v424 = vunpack.c.l.b16 %v377
    %v425 = vunpack.c.h.b16 %v377
    %v426 = vpack.c.b16 %v396, %v394
    %v427 = vpack.c.b16 %v397, %v395
    %v428 = vpack.c.b16 %v400, %v398
    %v429 = vpack.c.b16 %v401, %v399
    %v430 = vpack.c.b16 %v404, %v402
    %v431 = vpack.c.b16 %v405, %v403
    %v432 = vpack.c.b16 %v408, %v406
    %v433 = vpack.c.b16 %v409, %v407
    %v434 = vpack.c.b16 %v412, %v410
    %v435 = vpack.c.b16 %v413, %v411
    %v436 = vpack.c.b16 %v416, %v414
    %v437 = vpack.c.b16 %v417, %v415
    %v438 = vpack.c.b16 %v420, %v418
    %v439 = vpack.c.b16 %v421, %v419
    %v440 = vpack.c.b16 %v424, %v422
    %v441 = vpack.c.b16 %v425, %v423
    %458 = vmatprep.subr.bf16.mxu0 %v427
    %459 = vmatpush1.bf16.xpose.msra.mxu0 %v426
    %460 = vmatprep.subr.bf16.mxu0 %v429
    %461 = vmatpush1.bf16.xpose.msra.mxu0 %v428
    %462 = vmatprep.subr.bf16.mxu0 %v431
    %463 = vmatpush1.bf16.xpose.msra.mxu0 %v430
    %464 = vmatprep.subr.bf16.mxu0 %v433
    %465 = vmatpush1.bf16.xpose.msra.mxu0 %v432
    %466 = vmatprep.subr.bf16.mxu0 %v435
    %467 = vmatpush1.bf16.xpose.msra.mxu0 %v434
    %468 = vmatprep.subr.bf16.mxu0 %v437
    %469 = vmatpush1.bf16.xpose.msra.mxu0 %v436
    %470 = vmatprep.subr.bf16.mxu0 %v439
    %471 = vmatpush1.bf16.xpose.msra.mxu0 %v438
    %472 = vmatprep.subr.bf16.mxu0 %v441
    %473 = vmatpush1.bf16.xpose.msra.mxu0 %v440
    %474 = vmatprep.subr.bf16.mxu0 0
    %475 = vmatpush1.bf16.xpose.msra.mxu0 0
    %476 = vmatprep.subr.bf16.mxu0 0
    %477 = vmatpush1.bf16.xpose.msra.mxu0 0
    %478 = vmatprep.subr.bf16.mxu0 0
    %479 = vmatpush1.bf16.xpose.msra.mxu0 0
    %480 = vmatprep.subr.bf16.mxu0 0
    %481 = vmatpush1.bf16.xpose.msra.mxu0 0
    %482 = vmatprep.subr.bf16.mxu0 0
    %483 = vmatpush1.bf16.xpose.msra.mxu0 0
    %484 = vmatprep.subr.bf16.mxu0 0
    %485 = vmatpush1.bf16.xpose.msra.mxu0 0
    %486 = vmatprep.subr.bf16.mxu0 0
    %487 = vmatpush1.bf16.xpose.msra.mxu0 0
    %488 = vmatprep.subr.bf16.mxu0 0
    %489 = vmatpush1.bf16.xpose.msra.mxu0 0
    %490 = vmatprep.mubr.bf16.mxu0 %v347
    %491 = vmatmul.mubr.bf16.gmra.mrb[0].mxu0 %v346
    %v492 = vpop.f32.mrb[0].mxu0
    %v493 = vadd.f32 0.0, %v492
    %v494 = vpop.f32.mrb[0].mxu0
    %v495 = vpop.f32.mrb[0].mxu0
    %v496 = vadd.f32 0.0, %v495
    %v497 = vpop.f32.mrb[0].mxu0
    %498 = vmatprep.mubr.bf16.mxu0 %v349
    %499 = vmatmul.mubr.bf16.gmra.mrb[0].mxu0 %v348
    %v500 = vpop.f32.mrb[0].mxu0
    %v501 = vadd.f32 0.0, %v500
    %v502 = vpop.f32.mrb[0].mxu0
    %v503 = vpop.f32.mrb[0].mxu0
    %v504 = vadd.f32 0.0, %v503
    %v505 = vpop.f32.mrb[0].mxu0
    %506 = vmatprep.mubr.bf16.mxu0 %v351
    %507 = vmatmul.mubr.bf16.gmra.mrb[0].mxu0 %v350
    %v508 = vpop.f32.mrb[0].mxu0
    %v509 = vadd.f32 0.0, %v508
    %v510 = vpop.f32.mrb[0].mxu0
    %v511 = vpop.f32.mrb[0].mxu0
    %v512 = vadd.f32 0.0, %v511
    %v513 = vpop.f32.mrb[0].mxu0
    %514 = vmatprep.mubr.bf16.mxu0 %v353
    %515 = vmatmul.mubr.bf16.gmra.mrb[0].mxu0 %v352
    %v516 = vpop.f32.mrb[0].mxu0
    %v517 = vadd.f32 0.0, %v516
    %v518 = vpop.f32.mrb[0].mxu0
    %v519 = vpop.f32.mrb[0].mxu0
    %v520 = vadd.f32 0.0, %v519
    %v521 = vpop.f32.mrb[0].mxu0
    %522 = vmatprep.mubr.bf16.mxu0 %v355
    %523 = vmatmul.mubr.bf16.gmra.mrb[0].mxu0 %v354
    %v524 = vpop.f32.mrb[0].mxu0
    %v525 = vadd.f32 0.0, %v524
    %v526 = vpop.f32.mrb[0].mxu0
    %v527 = vpop.f32.mrb[0].mxu0
    %v528 = vadd.f32 0.0, %v527
    %v529 = vpop.f32.mrb[0].mxu0
    %530 = vmatprep.mubr.bf16.mxu0 %v357
    %531 = vmatmul.mubr.bf16.gmra.mrb[0].mxu0 %v356
    %v532 = vpop.f32.mrb[0].mxu0
    %v533 = vadd.f32 0.0, %v532
    %v534 = vpop.f32.mrb[0].mxu0
    %v535 = vpop.f32.mrb[0].mxu0
    %v536 = vadd.f32 0.0, %v535
    %v537 = vpop.f32.mrb[0].mxu0
    %538 = vmatprep.mubr.bf16.mxu0 %v359
    %539 = vmatmul.mubr.bf16.gmra.mrb[0].mxu0 %v358
    %v540 = vpop.f32.mrb[0].mxu0
    %v541 = vadd.f32 0.0, %v540
    %v542 = vpop.f32.mrb[0].mxu0
    %v543 = vpop.f32.mrb[0].mxu0
    %v544 = vadd.f32 0.0, %v543
    %v545 = vpop.f32.mrb[0].mxu0
    %546 = vmatprep.mubr.bf16.mxu0 %v361
    %547 = vmatmul.mubr.bf16.gmra.mrb[0].mxu0 %v360
    %v548 = vpop.f32.mrb[0].mxu0
    %v549 = vadd.f32 0.0, %v548
    %v550 = vpop.f32.mrb[0].mxu0
    %v551 = vpop.f32.mrb[0].mxu0
    %v552 = vadd.f32 0.0, %v551
    %v553 = vpop.f32.mrb[0].mxu0
    %554 = vdwg.mxu0
    %v555 = vpack.c.bf16 %v496, %v493
    %v556 = vpack.c.bf16 %v504, %v501
    %v557 = vpack.c.bf16 %v512, %v509
    %v558 = vpack.c.bf16 %v520, %v517
    %v559 = vpack.c.bf16 %v528, %v525
    %v560 = vpack.c.bf16 %v536, %v533
    %v561 = vpack.c.bf16 %v544, %v541
    %v562 = vpack.c.bf16 %v552, %v549
    %v571 = vunpack.c.l.b16 %v555
    %v572 = vunpack.c.h.b16 %v555
    %v573 = vunpack.c.l.b16 %v556
    %v574 = vunpack.c.h.b16 %v556
    %v575 = vunpack.c.l.b16 %v557
    %v576 = vunpack.c.h.b16 %v557
    %v577 = vunpack.c.l.b16 %v558
    %v578 = vunpack.c.h.b16 %v558
    %v579 = vunpack.c.l.b16 %v559
    %v580 = vunpack.c.h.b16 %v559
    %v581 = vunpack.c.l.b16 %v560
    %v582 = vunpack.c.h.b16 %v560
    %v583 = vunpack.c.l.b16 %v561
    %v584 = vunpack.c.h.b16 %v561
    %v585 = vunpack.c.l.b16 %v562
    %v586 = vunpack.c.h.b16 %v562
    %v587 = vpack.c.b16 %v571, %v571
    %v588 = vpack.c.b16 %v572, %v572
    %v589 = vpack.c.b16 %v573, %v573
    %v590 = vpack.c.b16 %v574, %v574
    %v591 = vpack.c.b16 %v575, %v575
    %v592 = vpack.c.b16 %v576, %v576
    %v593 = vpack.c.b16 %v577, %v577
    %v594 = vpack.c.b16 %v578, %v578
    %v595 = vpack.c.b16 %v579, %v579
    %v596 = vpack.c.b16 %v580, %v580
    %v597 = vpack.c.b16 %v581, %v581
    %v598 = vpack.c.b16 %v582, %v582
    %v599 = vpack.c.b16 %v583, %v583
    %v600 = vpack.c.b16 %v584, %v584
    %v601 = vpack.c.b16 %v585, %v585
    %v602 = vpack.c.b16 %v586, %v586
    %619 = vst [vmem:[#allocation8] sm:$0xf] %v587
    %620 = vst [vmem:[#allocation8 + $0x4] sm:$0xf] %v588
    %621 = vst [vmem:[#allocation8 + $0x8] sm:$0xf] %v589
    %622 = vst [vmem:[#allocation8 + $0xc] sm:$0xf] %v590
    %623 = vst [vmem:[#allocation8 + $0x10] sm:$0xf] %v591
    %624 = vst [vmem:[#allocation8 + $0x14] sm:$0xf] %v592
    %625 = vst [vmem:[#allocation8 + $0x18] sm:$0xf] %v593
    %626 = vst [vmem:[#allocation8 + $0x1c] sm:$0xf] %v594
    %627 = vst [vmem:[#allocation8 + $0x20] sm:$0xf] %v595
    %628 = vst [vmem:[#allocation8 + $0x24] sm:$0xf] %v596
    %629 = vst [vmem:[#allocation8 + $0x28] sm:$0xf] %v597
    %630 = vst [vmem:[#allocation8 + $0x2c] sm:$0xf] %v598
    %631 = vst [vmem:[#allocation8 + $0x30] sm:$0xf] %v599
    %632 = vst [vmem:[#allocation8 + $0x34] sm:$0xf] %v600
    %633 = vst [vmem:[#allocation8 + $0x38] sm:$0xf] %v601
    %634 = vst [vmem:[#allocation8 + $0x3c] sm:$0xf] %v602
    // Predicated region
    $region26: #{_swiglu_linear_impl.1} parent=1 // pred_check
      _
    $region27: #{_swiglu_linear_impl.1} parent=1 // pred_check_branch
      %636 = sbr.rel (0) target = $region29
    $region28: #{_swiglu_linear_impl.1} parent=1 // pred_region
      %s638 = ssub.s32 1024, 1024
      %639 = vsyncadd [#allocation4], %s638
      %s640 = sshll.u32 [#allocation8], 4
      %s641 = int_to_ptr.vmem [resolvable:$true] %s640
      %646 = dma.vmem_to_hbm [thread:$0]  %s641, 1024, %s3, [#allocation4], 64, 64, 4
    $region29: #{_swiglu_linear_impl.1} parent=1 // pred_fallthru
      _
    // Predicated region
    $region30: #{_swiglu_linear_impl.1} parent=1 // pred_check
      _
    $region31: #{_swiglu_linear_impl.1} parent=1 // pred_check_branch
      %648 = sbr.rel (0) target = $region33
    $region32: #{_swiglu_linear_impl.1} parent=1 // pred_region
      %649 = dma.done [#allocation4], 1024
    $region33: #{_swiglu_linear_impl.1} parent=1 // pred_fallthru
      _
    %650 = vsyncpa [#allocation3], 1
    %651 = vsyncpa [#allocation6], 1
    %652 = vsyncpa [#allocation4], 1

</llo_original>
